<compile_context>
chip_gen: v5e
topology: v5e:2x2
jax: 0.10.0
libtpu: 0.0.40
codegen_flags: <defaults>
</compile_context>

<pallas_src>
import functools

import jax
import jax.numpy as jnp
from jax.experimental import pallas as pl
from jax.experimental.pallas import tpu as pltpu

LANE = 128       # TPU lane width
ROW_ALIGN = 16   # row granularity for packed-batch tiles (bf16 sublane packing = 16)


def _round_up(n, m):
    return ((n + m - 1) // m) * m


def packing_group(in_features):
    """How many logical batch rows are packed per 128-lane row."""
    return max(1, LANE // in_features)


# ---------------------------------------------------------------------------
# Kernel
# ---------------------------------------------------------------------------
def ppo_kernel(x_ref, w1_ref, b1_ref, w2_ref, b2_ref, w3_ref, b3_ref, o_ref):
    """relu(relu(x@W1+b1)@W2+b2)@W3+b3 on one packed batch tile (block-diag weights)."""
    x = x_ref[...]                                               # [tm, G*in]  bf16
    h1 = jnp.dot(x, w1_ref[...], preferred_element_type=jnp.float32)
    h1 = jnp.maximum(h1 + b1_ref[...], 0.0)                      # f32 VPU (v5e-safe)
    h2 = jnp.dot(h1.astype(jnp.bfloat16), w2_ref[...],
                 preferred_element_type=jnp.float32)
    h2 = jnp.maximum(h2 + b2_ref[...], 0.0)
    out = jnp.dot(h2.astype(jnp.bfloat16), w3_ref[...],
                  preferred_element_type=jnp.float32)
    o_ref[...] = (out + b3_ref[...]).astype(o_ref.dtype)


@functools.partial(jax.jit, static_argnames=("tm",))
def _ppo_forward_packed(x_packed, w1, b1, w2, b2, w3, b3, *, tm):
    """x_packed: [R, G*in] bf16; block-diagonal weights; returns [R, G*out] f32."""
    r, in_packed = x_packed.shape
    hid_packed = w1.shape[1]
    out_packed = w3.shape[1]
    grid = (r // tm,)
    return pl.pallas_call(
        ppo_kernel,
        out_shape=jax.ShapeDtypeStruct((r, out_packed), jnp.float32),
        grid=grid,
        in_specs=[
            # Packed batch tiles stream (double-buffered) over the parallel grid axis.
            pl.BlockSpec((tm, in_packed), lambda i: (i, 0)),
            # Weights / biases: constant index_map -> fetched once, VMEM-resident.
            pl.BlockSpec((in_packed, hid_packed), lambda i: (0, 0)),
            pl.BlockSpec((1, hid_packed), lambda i: (0, 0)),
            pl.BlockSpec((hid_packed, hid_packed), lambda i: (0, 0)),
            pl.BlockSpec((1, hid_packed), lambda i: (0, 0)),
            pl.BlockSpec((hid_packed, out_packed), lambda i: (0, 0)),
            pl.BlockSpec((1, out_packed), lambda i: (0, 0)),
        ],
        out_specs=pl.BlockSpec((tm, out_packed), lambda i: (i, 0)),
        compiler_params=pltpu.CompilerParams(
            dimension_semantics=("parallel",),
        ),
    )(x_packed, w1, b1, w2, b2, w3, b3)


# ---------------------------------------------------------------------------
# Host-side packing / wrapper
# ---------------------------------------------------------------------------
def pack_params(w1, b1, w2, b2, w3, b3, group):
    """Expand per-layer params into packed block-diagonal form.

    Weights are stored as [in, out] (transpose of torch's nn.Linear.weight), expanded
    to kron(I_group, W) in bf16; biases are tiled `group` times (kept in f32 so the
    bias add / ReLU stay exact f32 on the VPU).
    """
    def bd(w):
        w = jnp.asarray(w, jnp.float32)
        return jnp.kron(jnp.eye(group, dtype=jnp.float32), w).astype(jnp.bfloat16)

    def tb(b):
        return jnp.tile(jnp.asarray(b, jnp.float32).reshape(1, -1), (1, group))

    return {
        "w1": bd(w1), "b1": tb(b1),
        "w2": bd(w2), "b2": tb(b2),
        "w3": bd(w3), "b3": tb(b3),
        "w1_f32": jnp.asarray(w1, jnp.float32), "b1_f32": jnp.asarray(b1, jnp.float32),
        "w2_f32": jnp.asarray(w2, jnp.float32), "b2_f32": jnp.asarray(b2, jnp.float32),
        "w3_f32": jnp.asarray(w3, jnp.float32), "b3_f32": jnp.asarray(b3, jnp.float32),
        "group": group,
        "in_features": w1.shape[0],
        "out_features": w3.shape[1],
    }


def ppo_forward(x, params, *, tm=512, xla_fast_path_max_batch=0):
    """x: [B, in_features] f32 -> [B, out_features] f32."""
    b, in_f = x.shape
    g = params["group"]
    out_f = params["out_features"]
    assert in_f == params["in_features"]

    if b <= xla_fast_path_max_batch:
        # Inference-style tiny batch: skip kernel launch + weight DMA entirely.
        h1 = jnp.maximum(x @ params["w1_f32"] + params["b1_f32"], 0.0)
        h2 = jnp.maximum(h1 @ params["w2_f32"] + params["b2_f32"], 0.0)
        return h2 @ params["w3_f32"] + params["b3_f32"]

    # Packed rows needed (g logical rows per packed row).
    rows_needed = max(1, -(-b // g))
    # Tile height: user tm clamped to the batch, multiple of ROW_ALIGN.
    tm = max(ROW_ALIGN, _round_up(min(tm, _round_up(rows_needed, ROW_ALIGN)), ROW_ALIGN))
    # Guarantee >= 2 grid steps when the batch allows it, so v7x megacore can shard
    # the "parallel" axis across both TensorCores (cost on v5e/v6e: one ~0.35us step).
    if rows_needed >= 2 * ROW_ALIGN:
        tm = min(tm, _round_up((rows_needed + 1) // 2, ROW_ALIGN))

    r_pad = _round_up(rows_needed, tm)
    b_pad = r_pad * g

    # bf16 in HBM; zero rows in the padded tail are harmless (sliced off below).
    x_pad = jnp.zeros((b_pad, in_f), jnp.bfloat16).at[:b].set(x.astype(jnp.bfloat16))
    x_packed = x_pad.reshape(r_pad, g * in_f)

    out_packed = _ppo_forward_packed(
        x_packed,
        params["w1"], params["b1"],
        params["w2"], params["b2"],
        params["w3"], params["b3"],
        tm=tm,
    )
    return out_packed.reshape(b_pad, out_f)[:b]


# ---------------------------------------------------------------------------
# Init / reference
# ---------------------------------------------------------------------------
def init_linear_params(key, in_features, out_features):
    """Deterministic init mimicking nn.Linear's default U(-1/sqrt(in), 1/sqrt(in))."""
    kw, kb = jax.random.split(key)
    bound = 1.0 / jnp.sqrt(jnp.float32(in_features))
    # Stored as [in, out] so the kernel computes x @ W directly.
    w = jax.random.uniform(kw, (in_features, out_features), jnp.float32, -bound, bound)
    b = jax.random.uniform(kb, (out_features,), jnp.float32, -bound, bound)
    return w, b


def reference_forward(x, w1, b1, w2, b2, w3, b3):
    h1 = jnp.maximum(x @ w1 + b1, 0.0)
    h2 = jnp.maximum(h1 @ w2 + b2, 0.0)
    return h2 @ w3 + b3


def _bf16_round(a):
    return jnp.asarray(a, jnp.float32).astype(jnp.bfloat16).astype(jnp.float32)


if __name__ == "__main__":
    # Module hyperparameters (small, consistent with PPO.__init__):
    input_layers = 16
    output_layers = 8
    lanes = 4
    max_lane_occupancy = 8
    hidden = lanes * max_lane_occupancy  # 32

    key = jax.random.PRNGKey(0)
    kx, k1, k2, k3, kx2 = jax.random.split(key, 5)

    w1, b1 = init_linear_params(k1, input_layers, hidden)
    w2, b2 = init_linear_params(k2, hidden, hidden)
    w3, b3 = init_linear_params(k3, hidden, output_layers)

    group = packing_group(input_layers)      # 8 rows per 128-lane packed row
    params = pack_params(w1, b1, w2, b2, w3, b3, group)

    # --- small batch (module-sized demo) ---
    batch = 2
    x = jax.random.normal(kx, (batch, input_layers), jnp.float32)
    out = jax.block_until_ready(ppo_forward(x, params))
    assert out.shape == (batch, output_layers)

    # Kernel numerics = bf16 MXU operands with f32 accumulation; compare against a
    # reference with bf16-rounded inputs/weights (tight) and pure-f32 (loose sanity).
    ref_bf16 = reference_forward(_bf16_round(x), _bf16_round(w1), b1,
                                 _bf16_round(w2), b2, _bf16_round(w3), b3)
    ref_f32 = reference_forward(x, w1, b1, w2, b2, w3, b3)
    assert jnp.allclose(out, ref_bf16, atol=3e-2, rtol=3e-2), "mismatch (small batch)"
    assert jnp.allclose(out, ref_f32, atol=1.5e-1, rtol=1e-1), "gross mismatch (small)"

    # --- larger batch: exercises row packing, padding and a >=2-step parallel grid ---
    batch2 = 400
    x2 = jax.random.normal(kx2, (batch2, input_layers), jnp.float32)
    out2 = jax.block_until_ready(ppo_forward(x2, params))
    assert out2.shape == (batch2, output_layers)

    ref2_bf16 = reference_forward(_bf16_round(x2), _bf16_round(w1), b1,
                                  _bf16_round(w2), b2, _bf16_round(w3), b3)
    ref2_f32 = reference_forward(x2, w1, b1, w2, b2, w3, b3)
    assert jnp.allclose(out2, ref2_bf16, atol=3e-2, rtol=3e-2), "mismatch (large batch)"
    assert jnp.allclose(out2, ref2_f32, atol=1.5e-1, rtol=1e-1), "gross mismatch (large)"

    print("KERNEL_OK")
</pallas_src>

<mosaic_0001>
module attributes {stable_mosaic.version = 11 : i64} {
  func.func @ppo_kernel(%arg0: i32, %arg1: memref<16x128xbf16, #tpu.memory_space<vmem>>, %arg2: memref<128x256xbf16, #tpu.memory_space<vmem>>, %arg3: memref<1x256xf32, #tpu.memory_space<vmem>>, %arg4: memref<256x256xbf16, #tpu.memory_space<vmem>>, %arg5: memref<1x256xf32, #tpu.memory_space<vmem>>, %arg6: memref<256x64xbf16, #tpu.memory_space<vmem>>, %arg7: memref<1x64xf32, #tpu.memory_space<vmem>>, %arg8: memref<16x64xf32, #tpu.memory_space<vmem>>) attributes {dimension_semantics = [#tpu.dimension_semantics<parallel>], iteration_bounds = array<i64: 1>, scalar_prefetch = 0 : i64, scratch_operands = 0 : i64, tpu.core_type = #tpu.core_type<tc>, window_params = [{transform_indices = @transform_0, window_bounds = array<i64: 16, 128>}, {pipeline_mode = #tpu.pipeline_mode<synchronous>, transform_indices = @transform_1, window_bounds = array<i64: 128, 256>}, {pipeline_mode = #tpu.pipeline_mode<synchronous>, transform_indices = @transform_2, window_bounds = array<i64: 1, 256>}, {pipeline_mode = #tpu.pipeline_mode<synchronous>, transform_indices = @transform_3, window_bounds = array<i64: 256, 256>}, {pipeline_mode = #tpu.pipeline_mode<synchronous>, transform_indices = @transform_4, window_bounds = array<i64: 1, 256>}, {pipeline_mode = #tpu.pipeline_mode<synchronous>, transform_indices = @transform_5, window_bounds = array<i64: 256, 64>}, {pipeline_mode = #tpu.pipeline_mode<synchronous>, transform_indices = @transform_6, window_bounds = array<i64: 1, 64>}, {transform_indices = @transform_7, window_bounds = array<i64: 16, 64>}]} {
    %c0 = arith.constant 0 : index
    %c0_0 = arith.constant 0 : index
    %0 = vector.load %arg1[%c0, %c0_0] : memref<16x128xbf16, #tpu.memory_space<vmem>>, vector<16x128xbf16>
    %c0_1 = arith.constant 0 : index
    %c0_2 = arith.constant 0 : index
    %1 = vector.load %arg2[%c0_1, %c0_2] : memref<128x256xbf16, #tpu.memory_space<vmem>>, vector<128x256xbf16>
    %cst = arith.constant dense<0.000000e+00> : vector<16x256xf32>
    %2 = tpu.matmul %0, %1, %cst {dimension_numbers = #tpu.dot_dimension_numbers<[1], [0], [0], [1], [0, 0, 1, 1], [], []>} : vector<16x128xbf16>, vector<128x256xbf16>, vector<16x256xf32> -> vector<16x256xf32>
    %c0_3 = arith.constant 0 : index
    %c0_4 = arith.constant 0 : index
    %3 = vector.load %arg3[%c0_3, %c0_4] : memref<1x256xf32, #tpu.memory_space<vmem>>, vector<1x256xf32>
    %4 = vector.broadcast %3 : vector<1x256xf32> to vector<16x256xf32>
    %5 = arith.addf %2, %4 : vector<16x256xf32>
    %cst_5 = arith.constant 0.000000e+00 : f32
    %6 = vector.broadcast %cst_5 : f32 to vector<16x256xf32>
    %7 = arith.maximumf %5, %6 : vector<16x256xf32>
    %8 = arith.truncf %7 : vector<16x256xf32> to vector<16x256xbf16>
    %c0_6 = arith.constant 0 : index
    %c0_7 = arith.constant 0 : index
    %9 = vector.load %arg4[%c0_6, %c0_7] : memref<256x256xbf16, #tpu.memory_space<vmem>>, vector<256x256xbf16>
    %cst_8 = arith.constant dense<0.000000e+00> : vector<16x256xf32>
    %10 = tpu.matmul %8, %9, %cst_8 {dimension_numbers = #tpu.dot_dimension_numbers<[1], [0], [0], [1], [0, 0, 1, 1], [], []>} : vector<16x256xbf16>, vector<256x256xbf16>, vector<16x256xf32> -> vector<16x256xf32>
    %c0_9 = arith.constant 0 : index
    %c0_10 = arith.constant 0 : index
    %11 = vector.load %arg5[%c0_9, %c0_10] : memref<1x256xf32, #tpu.memory_space<vmem>>, vector<1x256xf32>
    %12 = vector.broadcast %11 : vector<1x256xf32> to vector<16x256xf32>
    %13 = arith.addf %10, %12 : vector<16x256xf32>
    %cst_11 = arith.constant 0.000000e+00 : f32
    %14 = vector.broadcast %cst_11 : f32 to vector<16x256xf32>
    %15 = arith.maximumf %13, %14 : vector<16x256xf32>
    %16 = arith.truncf %15 : vector<16x256xf32> to vector<16x256xbf16>
    %c0_12 = arith.constant 0 : index
    %c0_13 = arith.constant 0 : index
    %17 = vector.load %arg6[%c0_12, %c0_13] : memref<256x64xbf16, #tpu.memory_space<vmem>>, vector<256x64xbf16>
    %cst_14 = arith.constant dense<0.000000e+00> : vector<16x64xf32>
    %18 = tpu.matmul %16, %17, %cst_14 {dimension_numbers = #tpu.dot_dimension_numbers<[1], [0], [0], [1], [0, 0, 1, 1], [], []>} : vector<16x256xbf16>, vector<256x64xbf16>, vector<16x64xf32> -> vector<16x64xf32>
    %c0_15 = arith.constant 0 : index
    %c0_16 = arith.constant 0 : index
    %19 = vector.load %arg7[%c0_15, %c0_16] : memref<1x64xf32, #tpu.memory_space<vmem>>, vector<1x64xf32>
    %20 = vector.broadcast %19 : vector<1x64xf32> to vector<16x64xf32>
    %21 = arith.addf %18, %20 : vector<16x64xf32>
    %c0_17 = arith.constant 0 : index
    %c0_18 = arith.constant 0 : index
    %22 = vector.load %arg8[%c0_17, %c0_18] : memref<16x64xf32, #tpu.memory_space<vmem>>, vector<16x64xf32>
    tpu.vector_store %arg8[%c0_17, %c0_18], %21 {strides = array<i32>} : memref<16x64xf32, #tpu.memory_space<vmem>>, vector<16x64xf32>,
    return
  }
  func.func @transform_0(%arg0: i32) -> (i32, i32) {
    %c0_i32 = arith.constant 0 : i32
    %c0_i32_0 = arith.constant 0 : i32
    return %arg0, %c0_i32 : i32, i32
  }
  func.func @transform_1(%arg0: i32) -> (i32, i32) {
    %c0_i32 = arith.constant 0 : i32
    %c0_i32_0 = arith.constant 0 : i32
    %c0_i32_1 = arith.constant 0 : i32
    return %c0_i32, %c0_i32_0 : i32, i32
  }
  func.func @transform_2(%arg0: i32) -> (i32, i32) {
    %c0_i32 = arith.constant 0 : i32
    %c0_i32_0 = arith.constant 0 : i32
    %c0_i32_1 = arith.constant 0 : i32
    return %c0_i32, %c0_i32_0 : i32, i32
  }
  func.func @transform_3(%arg0: i32) -> (i32, i32) {
    %c0_i32 = arith.constant 0 : i32
    %c0_i32_0 = arith.constant 0 : i32
    %c0_i32_1 = arith.constant 0 : i32
    return %c0_i32, %c0_i32_0 : i32, i32
  }
  func.func @transform_4(%arg0: i32) -> (i32, i32) {
    %c0_i32 = arith.constant 0 : i32
    %c0_i32_0 = arith.constant 0 : i32
    %c0_i32_1 = arith.constant 0 : i32
    return %c0_i32, %c0_i32_0 : i32, i32
  }
  func.func @transform_5(%arg0: i32) -> (i32, i32) {
    %c0_i32 = arith.constant 0 : i32
    %c0_i32_0 = arith.constant 0 : i32
    %c0_i32_1 = arith.constant 0 : i32
    return %c0_i32, %c0_i32_0 : i32, i32
  }
  func.func @transform_6(%arg0: i32) -> (i32, i32) {
    %c0_i32 = arith.constant 0 : i32
    %c0_i32_0 = arith.constant 0 : i32
    %c0_i32_1 = arith.constant 0 : i32
    return %c0_i32, %c0_i32_0 : i32, i32
  }
  func.func @transform_7(%arg0: i32) -> (i32, i32) {
    %c0_i32 = arith.constant 0 : i32
    %c0_i32_0 = arith.constant 0 : i32
    return %arg0, %c0_i32 : i32, i32
  }
}

</mosaic_0001>

<llo_original>
// kernel: _ppo_forward_packed.1
$region0: #{_ppo_forward_packed.1}
  #allocation0 [shape = 'u32[]', space=smem, size = 0x4, offset = 0x4, fixed_abs, tag = 'smem constant byte address 0x4 - core index']
  #allocation1 [shape = 'u32[72,128]{1,0:T(1,128)}', space=vmem, size = 0x9000, scoped, tag = 'internal scratch']
  %s0 = inlined_call_operand.vmem [shape: bf16[16,128], index: 0, kind: input, shape index: {}]
  %s1 = inlined_call_operand.vmem [shape: bf16[128,256], index: 1, kind: input, shape index: {}]
  %s2 = inlined_call_operand.vmem [shape: f32[1,256], index: 2, kind: input, shape index: {}]
  %s3 = inlined_call_operand.hbm [shape: bf16[256,256], index: 3, kind: input, shape index: {}]
  %s4 = inlined_call_operand.vmem [shape: f32[1,256], index: 4, kind: input, shape index: {}]
  %s5 = inlined_call_operand.vmem [shape: bf16[256,64], index: 5, kind: input, shape index: {}]
  %s6 = inlined_call_operand.vmem [shape: f32[1,64], index: 6, kind: input, shape index: {}]
  %s7 = inlined_call_operand.hbm [shape: f32[16,64], index: 7, kind: output, shape index: {}]
  %s8 = sld [smem:[#allocation0]]
  $region42: #{_ppo_forward_packed.1} parent=0
    _
  %s10 = ssub.s32 1, %s8
  %s11 = scalar_select 0, %s10, %s8
  $region1: #{_ppo_forward_packed.1} parent=0
    #allocation2 [shape = 'u8[131072]{0}', space=vmem, size = 0x20000, scoped, tag = 'input window, operand 3, single buffered']
    #allocation3 [shape = 's32[1]{0}', space=sflag, size = 0x4, scoped, tag = 'scoped memory for _ppo_forward_packed.1']
    #allocation4 [shape = 's32[1]{0}', space=sflag, size = 0x4, scoped, tag = 'scoped memory for _ppo_forward_packed.1']
    #allocation5 [shape = 'u8[8192]{0}', space=vmem, size = 0x2000, scoped, tag = 'output window, operand 0, single buffered']
    %12 = vsyncpa [#allocation3], 0
    %13 = vsyncpa [#allocation4], 0
    // Predicated region
    $region2: #{_ppo_forward_packed.1} parent=1 // pred_check
      _
    $region3: #{_ppo_forward_packed.1} parent=1 // pred_check_branch
      %15 = sbr.rel (0) target = $region5
    $region4: #{_ppo_forward_packed.1} parent=1 // pred_region
      _
    $region5: #{_ppo_forward_packed.1} parent=1 // pred_fallthru
      _
    // Predicated region
    $region6: #{_ppo_forward_packed.1} parent=1 // pred_check
      _
    $region7: #{_ppo_forward_packed.1} parent=1 // pred_check_branch
      %17 = sbr.rel (0) target = $region9
    $region8: #{_ppo_forward_packed.1} parent=1 // pred_region
      _
    $region9: #{_ppo_forward_packed.1} parent=1 // pred_fallthru
      _
    // Predicated region
    $region10: #{_ppo_forward_packed.1} parent=1 // pred_check
      _
    $region11: #{_ppo_forward_packed.1} parent=1 // pred_check_branch
      %19 = sbr.rel (0) target = $region13
    $region12: #{_ppo_forward_packed.1} parent=1 // pred_region
      _
    $region13: #{_ppo_forward_packed.1} parent=1 // pred_fallthru
      _
    // Predicated region
    $region14: #{_ppo_forward_packed.1} parent=1 // pred_check
      _
    $region15: #{_ppo_forward_packed.1} parent=1 // pred_check_branch
      %21 = sbr.rel (0) target = $region17
    $region16: #{_ppo_forward_packed.1} parent=1 // pred_region
      %23 = vsyncadd [#allocation3], 0
      %s24 = sshll.u32 %s3, 4
      %s25 = int_to_ptr.hbm [resolvable:$true] %s24
      %s26 = sshll.u32 [#allocation2], 4
      %s27 = int_to_ptr.vmem [resolvable:$true] %s26
      %32 = dma.hbm_to_vmem [thread:$0]  %s25, 4096, %s27, [#allocation3], 128, 128, 8
    $region17: #{_ppo_forward_packed.1} parent=1 // pred_fallthru
      _
    // Predicated region
    $region18: #{_ppo_forward_packed.1} parent=1 // pred_check
      _
    $region19: #{_ppo_forward_packed.1} parent=1 // pred_check_branch
      %34 = sbr.rel (0) target = $region21
    $region20: #{_ppo_forward_packed.1} parent=1 // pred_region
      _
    $region21: #{_ppo_forward_packed.1} parent=1 // pred_fallthru
      _
    // Predicated region
    $region22: #{_ppo_forward_packed.1} parent=1 // pred_check
      _
    $region23: #{_ppo_forward_packed.1} parent=1 // pred_check_branch
      %36 = sbr.rel (0) target = $region25
    $region24: #{_ppo_forward_packed.1} parent=1 // pred_region
      _
    $region25: #{_ppo_forward_packed.1} parent=1 // pred_fallthru
      _
    // Predicated region
    $region26: #{_ppo_forward_packed.1} parent=1 // pred_check
      _
    $region27: #{_ppo_forward_packed.1} parent=1 // pred_check_branch
      %38 = sbr.rel (0) target = $region29
    $region28: #{_ppo_forward_packed.1} parent=1 // pred_region
      _
    $region29: #{_ppo_forward_packed.1} parent=1 // pred_fallthru
      _
    // Predicated region
    $region30: #{_ppo_forward_packed.1} parent=1 // pred_check
      _
    $region31: #{_ppo_forward_packed.1} parent=1 // pred_check_branch
      %40 = sbr.rel (0) target = $region33
    $region32: #{_ppo_forward_packed.1} parent=1 // pred_region
      %42 = dma.done [#allocation3], 4096
    $region33: #{_ppo_forward_packed.1} parent=1 // pred_fallthru
      _
    %v43 = vld [vmem:[%s0] sm:$0xf]
    %v44 = vld [vmem:[%s0 + $0x4] sm:$0xf]
    %v45 = vld [vmem:[%s1] sm:$0xff]
    %v46 = vld [vmem:[%s1 + $0x8] sm:$0xff]
    %v47 = vld [vmem:[%s1 + $0x10] sm:$0xff]
    %v48 = vld [vmem:[%s1 + $0x18] sm:$0xff]
    %v49 = vld [vmem:[%s1 + $0x20] sm:$0xff]
    %v50 = vld [vmem:[%s1 + $0x28] sm:$0xff]
    %v51 = vld [vmem:[%s1 + $0x30] sm:$0xff]
    %v52 = vld [vmem:[%s1 + $0x38] sm:$0xff]
    %v53 = vld [vmem:[%s1 + $0x40] sm:$0xff]
    %v54 = vld [vmem:[%s1 + $0x48] sm:$0xff]
    %v55 = vld [vmem:[%s1 + $0x50] sm:$0xff]
    %v56 = vld [vmem:[%s1 + $0x58] sm:$0xff]
    %v57 = vld [vmem:[%s1 + $0x60] sm:$0xff]
    %v58 = vld [vmem:[%s1 + $0x68] sm:$0xff]
    %v59 = vld [vmem:[%s1 + $0x70] sm:$0xff]
    %v60 = vld [vmem:[%s1 + $0x78] sm:$0xff]
    %v61 = vld [vmem:[%s2] sm:$0x3]
    %v63 = vperm.slane %v61, 0
    %v64 = vperm.slane %v61, 1
    %v69 = vunpack.c.l.b16 %v43
    %v70 = vunpack.c.l.b16 %v44
    %v71 = vpack.c.b16 %v70, %v69
    %v89 = vunpack.c.l.b16 %v45
    %v90 = vunpack.c.h.b16 %v45
    %v91 = vunpack.c.l.b16 %v46
    %v92 = vunpack.c.h.b16 %v46
    %v93 = vunpack.c.l.b16 %v47
    %v94 = vunpack.c.h.b16 %v47
    %v95 = vunpack.c.l.b16 %v48
    %v96 = vunpack.c.h.b16 %v48
    %v97 = vunpack.c.l.b16 %v49
    %v98 = vunpack.c.h.b16 %v49
    %v99 = vunpack.c.l.b16 %v50
    %v100 = vunpack.c.h.b16 %v50
    %v101 = vunpack.c.l.b16 %v51
    %v102 = vunpack.c.h.b16 %v51
    %v103 = vunpack.c.l.b16 %v52
    %v104 = vunpack.c.h.b16 %v52
    %v105 = vunpack.c.l.b16 %v53
    %v106 = vunpack.c.h.b16 %v53
    %v107 = vunpack.c.l.b16 %v54
    %v108 = vunpack.c.h.b16 %v54
    %v109 = vunpack.c.l.b16 %v55
    %v110 = vunpack.c.h.b16 %v55
    %v111 = vunpack.c.l.b16 %v56
    %v112 = vunpack.c.h.b16 %v56
    %v113 = vunpack.c.l.b16 %v57
    %v114 = vunpack.c.h.b16 %v57
    %v115 = vunpack.c.l.b16 %v58
    %v116 = vunpack.c.h.b16 %v58
    %v117 = vunpack.c.l.b16 %v59
    %v118 = vunpack.c.h.b16 %v59
    %v119 = vunpack.c.l.b16 %v60
    %v120 = vunpack.c.h.b16 %v60
    %v121 = vpack.c.b16 %v91, %v89
    %v122 = vpack.c.b16 %v92, %v90
    %v123 = vpack.c.b16 %v95, %v93
    %v124 = vpack.c.b16 %v96, %v94
    %v125 = vpack.c.b16 %v99, %v97
    %v126 = vpack.c.b16 %v100, %v98
    %v127 = vpack.c.b16 %v103, %v101
    %v128 = vpack.c.b16 %v104, %v102
    %v129 = vpack.c.b16 %v107, %v105
    %v130 = vpack.c.b16 %v108, %v106
    %v131 = vpack.c.b16 %v111, %v109
    %v132 = vpack.c.b16 %v112, %v110
    %v133 = vpack.c.b16 %v115, %v113
    %v134 = vpack.c.b16 %v116, %v114
    %v135 = vpack.c.b16 %v119, %v117
    %v136 = vpack.c.b16 %v120, %v118
    %153 = vmatpush.bf16.msra.mxu0 %v135
    %154 = vmatpush.bf16.msra.mxu0 %v133
    %155 = vmatpush.bf16.msra.mxu0 %v131
    %156 = vmatpush.bf16.msra.mxu0 %v129
    %157 = vmatpush.bf16.msra.mxu0 %v127
    %158 = vmatpush.bf16.msra.mxu0 %v125
    %159 = vmatpush.bf16.msra.mxu0 %v123
    %160 = vmatpush.bf16.msra.mxu0 %v121
    %161 = vmatmul.bf16.gmra.mxu0 %v71
    %v162 = vpop.f32.mrf.mxu0
    %v163 = vadd.f32 %v63, %v162
    %v164 = vpop.f32.mrf.mxu0
    %v165 = vadd.f32 %v63, %v164
    %166 = vdwg.mxu0
    %167 = vmatpush.bf16.msra.mxu0 %v136
    %168 = vmatpush.bf16.msra.mxu0 %v134
    %169 = vmatpush.bf16.msra.mxu0 %v132
    %170 = vmatpush.bf16.msra.mxu0 %v130
    %171 = vmatpush.bf16.msra.mxu0 %v128
    %172 = vmatpush.bf16.msra.mxu0 %v126
    %173 = vmatpush.bf16.msra.mxu0 %v124
    %174 = vmatpush.bf16.msra.mxu0 %v122
    %175 = vmatmul.bf16.gmra.mxu0 %v71
    %v176 = vpop.f32.mrf.mxu0
    %v177 = vadd.f32 %v64, %v176
    %v178 = vpop.f32.mrf.mxu0
    %v179 = vadd.f32 %v64, %v178
    %180 = vdwg.mxu0
    %v181 = vmax.f32 %v163, 0.0
    %v182 = vmax.f32 %v177, 0.0
    %v183 = vmax.f32 %v165, 0.0
    %v184 = vmax.f32 %v179, 0.0
    %v185 = vpack.c.bf16 %v183, %v181
    %v186 = vpack.c.bf16 %v184, %v182
    %v187 = vld [vmem:[#allocation2] sm:$0xff]
    %v188 = vld [vmem:[#allocation2 + $0x8] sm:$0xff]
    %v189 = vld [vmem:[#allocation2 + $0x10] sm:$0xff]
    %v190 = vld [vmem:[#allocation2 + $0x18] sm:$0xff]
    %v191 = vld [vmem:[#allocation2 + $0x20] sm:$0xff]
    %v192 = vld [vmem:[#allocation2 + $0x28] sm:$0xff]
    %v193 = vld [vmem:[#allocation2 + $0x30] sm:$0xff]
    %v194 = vld [vmem:[#allocation2 + $0x38] sm:$0xff]
    %v195 = vld [vmem:[#allocation2 + $0x40] sm:$0xff]
    %v196 = vld [vmem:[#allocation2 + $0x48] sm:$0xff]
    %v197 = vld [vmem:[#allocation2 + $0x50] sm:$0xff]
    %v198 = vld [vmem:[#allocation2 + $0x58] sm:$0xff]
    %v199 = vld [vmem:[#allocation2 + $0x60] sm:$0xff]
    %v200 = vld [vmem:[#allocation2 + $0x68] sm:$0xff]
    %v201 = vld [vmem:[#allocation2 + $0x70] sm:$0xff]
    %v202 = vld [vmem:[#allocation2 + $0x78] sm:$0xff]
    %v203 = vld [vmem:[#allocation2 + $0x80] sm:$0xff]
    %v204 = vld [vmem:[#allocation2 + $0x88] sm:$0xff]
    %v205 = vld [vmem:[#allocation2 + $0x90] sm:$0xff]
    %v206 = vld [vmem:[#allocation2 + $0x98] sm:$0xff]
    %v207 = vld [vmem:[#allocation2 + $0xa0] sm:$0xff]
    %v208 = vld [vmem:[#allocation2 + $0xa8] sm:$0xff]
    %v209 = vld [vmem:[#allocation2 + $0xb0] sm:$0xff]
    %v210 = vld [vmem:[#allocation2 + $0xb8] sm:$0xff]
    %v211 = vld [vmem:[#allocation2 + $0xc0] sm:$0xff]
    %v212 = vld [vmem:[#allocation2 + $0xc8] sm:$0xff]
    %v213 = vld [vmem:[#allocation2 + $0xd0] sm:$0xff]
    %v214 = vld [vmem:[#allocation2 + $0xd8] sm:$0xff]
    %v215 = vld [vmem:[#allocation2 + $0xe0] sm:$0xff]
    %v216 = vld [vmem:[#allocation2 + $0xe8] sm:$0xff]
    %v217 = vld [vmem:[#allocation2 + $0xf0] sm:$0xff]
    %v218 = vld [vmem:[#allocation2 + $0xf8] sm:$0xff]
    %v219 = vld [vmem:[%s4] sm:$0x3]
    %v221 = vperm.slane %v219, 0
    %v222 = vperm.slane %v219, 1
    %v257 = vunpack.c.l.b16 %v187
    %v258 = vunpack.c.h.b16 %v187
    %v259 = vunpack.c.l.b16 %v188
    %v260 = vunpack.c.h.b16 %v188
    %v261 = vunpack.c.l.b16 %v189
    %v262 = vunpack.c.h.b16 %v189
    %v263 = vunpack.c.l.b16 %v190
    %v264 = vunpack.c.h.b16 %v190
    %v265 = vunpack.c.l.b16 %v191
    %v266 = vunpack.c.h.b16 %v191
    %v267 = vunpack.c.l.b16 %v192
    %v268 = vunpack.c.h.b16 %v192
    %v269 = vunpack.c.l.b16 %v193
    %v270 = vunpack.c.h.b16 %v193
    %v271 = vunpack.c.l.b16 %v194
    %v272 = vunpack.c.h.b16 %v194
    %v273 = vunpack.c.l.b16 %v195
    %v274 = vunpack.c.h.b16 %v195
    %v275 = vunpack.c.l.b16 %v196
    %v276 = vunpack.c.h.b16 %v196
    %v277 = vunpack.c.l.b16 %v197
    %v278 = vunpack.c.h.b16 %v197
    %v279 = vunpack.c.l.b16 %v198
    %v280 = vunpack.c.h.b16 %v198
    %v281 = vunpack.c.l.b16 %v199
    %v282 = vunpack.c.h.b16 %v199
    %v283 = vunpack.c.l.b16 %v200
    %v284 = vunpack.c.h.b16 %v200
    %v285 = vunpack.c.l.b16 %v201
    %v286 = vunpack.c.h.b16 %v201
    %v287 = vunpack.c.l.b16 %v202
    %v288 = vunpack.c.h.b16 %v202
    %v289 = vunpack.c.l.b16 %v203
    %v290 = vunpack.c.h.b16 %v203
    %v291 = vunpack.c.l.b16 %v204
    %v292 = vunpack.c.h.b16 %v204
    %v293 = vunpack.c.l.b16 %v205
    %v294 = vunpack.c.h.b16 %v205
    %v295 = vunpack.c.l.b16 %v206
    %v296 = vunpack.c.h.b16 %v206
    %v297 = vunpack.c.l.b16 %v207
    %v298 = vunpack.c.h.b16 %v207
    %v299 = vunpack.c.l.b16 %v208
    %v300 = vunpack.c.h.b16 %v208
    %v301 = vunpack.c.l.b16 %v209
    %v302 = vunpack.c.h.b16 %v209
    %v303 = vunpack.c.l.b16 %v210
    %v304 = vunpack.c.h.b16 %v210
    %v305 = vunpack.c.l.b16 %v211
    %v306 = vunpack.c.h.b16 %v211
    %v307 = vunpack.c.l.b16 %v212
    %v308 = vunpack.c.h.b16 %v212
    %v309 = vunpack.c.l.b16 %v213
    %v310 = vunpack.c.h.b16 %v213
    %v311 = vunpack.c.l.b16 %v214
    %v312 = vunpack.c.h.b16 %v214
    %v313 = vunpack.c.l.b16 %v215
    %v314 = vunpack.c.h.b16 %v215
    %v315 = vunpack.c.l.b16 %v216
    %v316 = vunpack.c.h.b16 %v216
    %v317 = vunpack.c.l.b16 %v217
    %v318 = vunpack.c.h.b16 %v217
    %v319 = vunpack.c.l.b16 %v218
    %v320 = vunpack.c.h.b16 %v218
    %v321 = vpack.c.b16 %v259, %v257
    %v322 = vpack.c.b16 %v260, %v258
    %v323 = vpack.c.b16 %v263, %v261
    %v324 = vpack.c.b16 %v264, %v262
    %v325 = vpack.c.b16 %v267, %v265
    %v326 = vpack.c.b16 %v268, %v266
    %v327 = vpack.c.b16 %v271, %v269
    %v328 = vpack.c.b16 %v272, %v270
    %v329 = vpack.c.b16 %v275, %v273
    %v330 = vpack.c.b16 %v276, %v274
    %v331 = vpack.c.b16 %v279, %v277
    %v332 = vpack.c.b16 %v280, %v278
    %v333 = vpack.c.b16 %v283, %v281
    %v334 = vpack.c.b16 %v284, %v282
    %v335 = vpack.c.b16 %v287, %v285
    %v336 = vpack.c.b16 %v288, %v286
    %v337 = vpack.c.b16 %v291, %v289
    %v338 = vpack.c.b16 %v292, %v290
    %v339 = vpack.c.b16 %v295, %v293
    %v340 = vpack.c.b16 %v296, %v294
    %v341 = vpack.c.b16 %v299, %v297
    %v342 = vpack.c.b16 %v300, %v298
    %v343 = vpack.c.b16 %v303, %v301
    %v344 = vpack.c.b16 %v304, %v302
    %v345 = vpack.c.b16 %v307, %v305
    %v346 = vpack.c.b16 %v308, %v306
    %v347 = vpack.c.b16 %v311, %v309
    %v348 = vpack.c.b16 %v312, %v310
    %v349 = vpack.c.b16 %v315, %v313
    %v350 = vpack.c.b16 %v316, %v314
    %v351 = vpack.c.b16 %v319, %v317
    %v352 = vpack.c.b16 %v320, %v318
    %385 = vmatpush.bf16.msra.mxu0 %v335
    %386 = vmatpush.bf16.msra.mxu0 %v333
    %387 = vmatpush.bf16.msra.mxu0 %v331
    %388 = vmatpush.bf16.msra.mxu0 %v329
    %389 = vmatpush.bf16.msra.mxu0 %v327
    %390 = vmatpush.bf16.msra.mxu0 %v325
    %391 = vmatpush.bf16.msra.mxu0 %v323
    %392 = vmatpush.bf16.msra.mxu0 %v321
    %393 = vmatmul.bf16.gmra.mxu0 %v185
    %v394 = vpop.f32.mrf.mxu0
    %v395 = vadd.f32 %v221, %v394
    %v396 = vpop.f32.mrf.mxu0
    %v397 = vadd.f32 %v221, %v396
    %398 = vdwg.mxu0
    %399 = vmatpush.bf16.msra.mxu0 %v351
    %400 = vmatpush.bf16.msra.mxu0 %v349
    %401 = vmatpush.bf16.msra.mxu0 %v347
    %402 = vmatpush.bf16.msra.mxu0 %v345
    %403 = vmatpush.bf16.msra.mxu0 %v343
    %404 = vmatpush.bf16.msra.mxu0 %v341
    %405 = vmatpush.bf16.msra.mxu0 %v339
    %406 = vmatpush.bf16.msra.mxu0 %v337
    %407 = vmatmul.bf16.gmra.mxu0 %v186
    %v408 = vpop.f32.mrf.mxu0
    %v409 = vadd.f32 %v395, %v408
    %v410 = vpop.f32.mrf.mxu0
    %v411 = vadd.f32 %v397, %v410
    %412 = vdwg.mxu0
    %413 = vmatpush.bf16.msra.mxu0 %v336
    %414 = vmatpush.bf16.msra.mxu0 %v334
    %415 = vmatpush.bf16.msra.mxu0 %v332
    %416 = vmatpush.bf16.msra.mxu0 %v330
    %417 = vmatpush.bf16.msra.mxu0 %v328
    %418 = vmatpush.bf16.msra.mxu0 %v326
    %419 = vmatpush.bf16.msra.mxu0 %v324
    %420 = vmatpush.bf16.msra.mxu0 %v322
    %421 = vmatmul.bf16.gmra.mxu0 %v185
    %v422 = vpop.f32.mrf.mxu0
    %v423 = vadd.f32 %v222, %v422
    %v424 = vpop.f32.mrf.mxu0
    %v425 = vadd.f32 %v222, %v424
    %426 = vdwg.mxu0
    %427 = vmatpush.bf16.msra.mxu0 %v352
    %428 = vmatpush.bf16.msra.mxu0 %v350
    %429 = vmatpush.bf16.msra.mxu0 %v348
    %430 = vmatpush.bf16.msra.mxu0 %v346
    %431 = vmatpush.bf16.msra.mxu0 %v344
    %432 = vmatpush.bf16.msra.mxu0 %v342
    %433 = vmatpush.bf16.msra.mxu0 %v340
    %434 = vmatpush.bf16.msra.mxu0 %v338
    %435 = vmatmul.bf16.gmra.mxu0 %v186
    %v436 = vpop.f32.mrf.mxu0
    %v437 = vadd.f32 %v423, %v436
    %v438 = vpop.f32.mrf.mxu0
    %v439 = vadd.f32 %v425, %v438
    %440 = vdwg.mxu0
    %v441 = vmax.f32 %v409, 0.0
    %v442 = vmax.f32 %v437, 0.0
    %v443 = vmax.f32 %v411, 0.0
    %v444 = vmax.f32 %v439, 0.0
    %v445 = vpack.c.bf16 %v443, %v441
    %v446 = vpack.c.bf16 %v444, %v442
    %v447 = vld [vmem:[%s5] sm:$0xf]
    %v448 = vld [vmem:[%s5 + $0x4] sm:$0xf]
    %v449 = vld [vmem:[%s5 + $0x8] sm:$0xf]
    %v450 = vld [vmem:[%s5 + $0xc] sm:$0xf]
    %v451 = vld [vmem:[%s5 + $0x10] sm:$0xf]
    %v452 = vld [vmem:[%s5 + $0x14] sm:$0xf]
    %v453 = vld [vmem:[%s5 + $0x18] sm:$0xf]
    %v454 = vld [vmem:[%s5 + $0x1c] sm:$0xf]
    %v455 = vld [vmem:[%s5 + $0x20] sm:$0xf]
    %v456 = vld [vmem:[%s5 + $0x24] sm:$0xf]
    %v457 = vld [vmem:[%s5 + $0x28] sm:$0xf]
    %v458 = vld [vmem:[%s5 + $0x2c] sm:$0xf]
    %v459 = vld [vmem:[%s5 + $0x30] sm:$0xf]
    %v460 = vld [vmem:[%s5 + $0x34] sm:$0xf]
    %v461 = vld [vmem:[%s5 + $0x38] sm:$0xf]
    %v462 = vld [vmem:[%s5 + $0x3c] sm:$0xf]
    %v463 = vld [vmem:[%s5 + $0x40] sm:$0xf]
    %v464 = vld [vmem:[%s5 + $0x44] sm:$0xf]
    %v465 = vld [vmem:[%s5 + $0x48] sm:$0xf]
    %v466 = vld [vmem:[%s5 + $0x4c] sm:$0xf]
    %v467 = vld [vmem:[%s5 + $0x50] sm:$0xf]
    %v468 = vld [vmem:[%s5 + $0x54] sm:$0xf]
    %v469 = vld [vmem:[%s5 + $0x58] sm:$0xf]
    %v470 = vld [vmem:[%s5 + $0x5c] sm:$0xf]
    %v471 = vld [vmem:[%s5 + $0x60] sm:$0xf]
    %v472 = vld [vmem:[%s5 + $0x64] sm:$0xf]
    %v473 = vld [vmem:[%s5 + $0x68] sm:$0xf]
    %v474 = vld [vmem:[%s5 + $0x6c] sm:$0xf]
    %v475 = vld [vmem:[%s5 + $0x70] sm:$0xf]
    %v476 = vld [vmem:[%s5 + $0x74] sm:$0xf]
    %v477 = vld [vmem:[%s5 + $0x78] sm:$0xf]
    %v478 = vld [vmem:[%s5 + $0x7c] sm:$0xf]
    %v479 = vld [vmem:[%s6] sm:$0x1]
    %v481 = vperm.slane %v479, 0
    %v515 = vunpack.c.l.b16 %v447
    %v516 = vunpack.c.l.b16 %v448
    %v517 = vunpack.c.l.b16 %v449
    %v518 = vunpack.c.l.b16 %v450
    %v519 = vunpack.c.l.b16 %v451
    %v520 = vunpack.c.l.b16 %v452
    %v521 = vunpack.c.l.b16 %v453
    %v522 = vunpack.c.l.b16 %v454
    %v523 = vunpack.c.l.b16 %v455
    %v524 = vunpack.c.l.b16 %v456
    %v525 = vunpack.c.l.b16 %v457
    %v526 = vunpack.c.l.b16 %v458
    %v527 = vunpack.c.l.b16 %v459
    %v528 = vunpack.c.l.b16 %v460
    %v529 = vunpack.c.l.b16 %v461
    %v530 = vunpack.c.l.b16 %v462
    %v531 = vunpack.c.l.b16 %v463
    %v532 = vunpack.c.l.b16 %v464
    %v533 = vunpack.c.l.b16 %v465
    %v534 = vunpack.c.l.b16 %v466
    %v535 = vunpack.c.l.b16 %v467
    %v536 = vunpack.c.l.b16 %v468
    %v537 = vunpack.c.l.b16 %v469
    %v538 = vunpack.c.l.b16 %v470
    %v539 = vunpack.c.l.b16 %v471
    %v540 = vunpack.c.l.b16 %v472
    %v541 = vunpack.c.l.b16 %v473
    %v542 = vunpack.c.l.b16 %v474
    %v543 = vunpack.c.l.b16 %v475
    %v544 = vunpack.c.l.b16 %v476
    %v545 = vunpack.c.l.b16 %v477
    %v546 = vunpack.c.l.b16 %v478
    %v547 = vpack.c.b16 %v516, %v515
    %v548 = vpack.c.b16 %v518, %v517
    %v549 = vpack.c.b16 %v520, %v519
    %v550 = vpack.c.b16 %v522, %v521
    %v551 = vpack.c.b16 %v524, %v523
    %v552 = vpack.c.b16 %v526, %v525
    %v553 = vpack.c.b16 %v528, %v527
    %v554 = vpack.c.b16 %v530, %v529
    %v555 = vpack.c.b16 %v532, %v531
    %v556 = vpack.c.b16 %v534, %v533
    %v557 = vpack.c.b16 %v536, %v535
    %v558 = vpack.c.b16 %v538, %v537
    %v559 = vpack.c.b16 %v540, %v539
    %v560 = vpack.c.b16 %v542, %v541
    %v561 = vpack.c.b16 %v544, %v543
    %v562 = vpack.c.b16 %v546, %v545
    %579 = vmatpush.bf16.msra.mxu0 %v554
    %580 = vmatpush.bf16.msra.mxu0 %v553
    %581 = vmatpush.bf16.msra.mxu0 %v552
    %582 = vmatpush.bf16.msra.mxu0 %v551
    %583 = vmatpush.bf16.msra.mxu0 %v550
    %584 = vmatpush.bf16.msra.mxu0 %v549
    %585 = vmatpush.bf16.msra.mxu0 %v548
    %586 = vmatpush.bf16.msra.mxu0 %v547
    %587 = vmatmul.bf16.gmra.mxu0 %v445
    %v588 = vpop.f32.mrf.mxu0
    %v589 = vadd.f32 %v481, %v588
    %v590 = vpop.f32.mrf.mxu0
    %v591 = vadd.f32 %v481, %v590
    %592 = vdwg.mxu0
    %593 = vmatpush.bf16.msra.mxu0 %v562
    %594 = vmatpush.bf16.msra.mxu0 %v561
    %595 = vmatpush.bf16.msra.mxu0 %v560
    %596 = vmatpush.bf16.msra.mxu0 %v559
    %597 = vmatpush.bf16.msra.mxu0 %v558
    %598 = vmatpush.bf16.msra.mxu0 %v557
    %599 = vmatpush.bf16.msra.mxu0 %v556
    %600 = vmatpush.bf16.msra.mxu0 %v555
    %601 = vmatmul.bf16.gmra.mxu0 %v446
    %v602 = vpop.f32.mrf.mxu0
    %v603 = vadd.f32 %v589, %v602
    %v604 = vpop.f32.mrf.mxu0
    %v605 = vadd.f32 %v591, %v604
    %606 = vdwg.mxu0
    %vm607 = vcmask 523264
    %608 = vst.msk [vmem:[#allocation5] sm:$0xff] %vm607, %v603
    %609 = vst.msk [vmem:[#allocation5 + $0x8] sm:$0xff] %vm607, %v605
    // Predicated region
    $region34: #{_ppo_forward_packed.1} parent=1 // pred_check
      _
    $region35: #{_ppo_forward_packed.1} parent=1 // pred_check_branch
      %611 = sbr.rel (0) target = $region37
    $region36: #{_ppo_forward_packed.1} parent=1 // pred_region
      %613 = vsyncadd [#allocation4], 0
      %s614 = sshll.u32 [#allocation5], 4
      %s615 = int_to_ptr.vmem [resolvable:$true] %s614
      %s616 = sshll.u32 %s7, 4
      %s617 = int_to_ptr.hbm [resolvable:$true] %s616
      %622 = dma.vmem_to_hbm [thread:$0]  %s615, 256, %s617, [#allocation4], 128, 128, 8
    $region37: #{_ppo_forward_packed.1} parent=1 // pred_fallthru
      _
    // Predicated region
    $region38: #{_ppo_forward_packed.1} parent=1 // pred_check
      _
    $region39: #{_ppo_forward_packed.1} parent=1 // pred_check_branch
      %624 = sbr.rel (0) target = $region41
    $region40: #{_ppo_forward_packed.1} parent=1 // pred_region
      %626 = dma.done [#allocation4], 256
    $region41: #{_ppo_forward_packed.1} parent=1 // pred_fallthru
      _
    %627 = vsyncpa [#allocation3], 1
    %628 = vsyncpa [#allocation4], 1

</llo_original>
